<compile_context>
chip_gen: v5e
topology: v5e:2x2
jax: 0.10.0
libtpu: 0.0.40
codegen_flags: <defaults>
</compile_context>

<pallas_src>
import jax
import jax.numpy as jnp
from jax.experimental import pallas as pl
from jax.experimental.pallas import tpu as pltpu


def attention_kernel(hid_ref, enc_ref, we_ref, wh_ref, bv_ref, out_ref):
    # One grid step == one batch element b (grid axis marked "parallel").
    #   hid_ref : (1, 1, dec_h)         f32   decoder hidden state for b
    #   enc_ref : (1, src_len, enc_h2)  bf16  batch-major encoder slab for b
    #   we_ref  : (dec_h, enc_h2)       bf16  attn weight, encoder columns
    #   wh_ref  : (dec_h, dec_h)        f32   attn weight, hidden columns
    #   bv_ref  : (dec_h, 2)            f32   col 0 = attn bias, col 1 = v weight
    #   out_ref : (1, 1, src_len)       f32   softmax attention row for b
    enc_b = enc_ref[0]                                                   # (src_len, enc_h2) bf16
    hid_row = hid_ref[0]                                                 # (1, dec_h)        f32

    # Hidden-path projection on the VPU in f32 (tiny; keeps the MXU free and
    # exact):  hid_col[d] = sum_j Wh[d, j] * hidden[b, j]
    hid_col = jnp.sum(wh_ref[...] * hid_row, axis=1, keepdims=True)      # (dec_h, 1)

    # Encoder-path projection on the MXU (bf16 inputs, f32 accumulation),
    # contracting the minor dim of both operands (q @ k.T pattern, no
    # materialized transpose):  pre[d, s] = sum_e We[d, e] * enc[b, s, e]
    pre = jax.lax.dot_general(
        we_ref[...], enc_b, (((1,), (1,)), ((), ())),
        preferred_element_type=jnp.float32)                              # (dec_h, src_len)

    # energy[d, s] = tanh(pre + Wh.hid + bias)   ((dec_h, 1) lane-broadcasts)
    energy = jnp.tanh(pre + hid_col + bv_ref[:, 0:1])                    # (dec_h, src_len)

    # v-projection: reduce over dec_h (sublane axis) -> lane-dense score row.
    score = jnp.sum(energy * bv_ref[:, 1:2], axis=0, keepdims=True)      # (1, src_len)

    # Numerically stable softmax over src_len (lane axis).  Exact
    # normalization (no approx reciprocal) so every row sums to 1.
    m = jnp.max(score, axis=-1, keepdims=True)
    e = jnp.exp(score - m)
    out_ref[0] = e / jnp.sum(e, axis=-1, keepdims=True)                  # (1, src_len)


def prepare_encoder_outputs(encoder_outputs):
    """One-time prep per source sequence (hoist OUTSIDE the decoder loop):
    [src_len, B, 2*enc_h] f32  ->  batch-major bf16 [B, src_len, 2*enc_h].

    Amortized over every decoder timestep, this halves the dominant HBM->VMEM
    DMA stream (bf16) and gives each grid step a contiguous per-batch slab."""
    return jnp.transpose(encoder_outputs, (1, 0, 2)).astype(jnp.bfloat16)


def attention_forward(hidden, enc_prepared, w_attn, b_attn, v_w):
    """hidden: [B, dec_h] f32; enc_prepared: [B, src_len, 2*enc_h] bf16
    (from prepare_encoder_outputs).  Returns softmax weights [B, src_len]."""
    B, src_len, enc_h2 = enc_prepared.shape
    dec_h = hidden.shape[1]

    # Split the concat weight (cat order is [hidden | encoder]); keep original
    # (out_dim, in_dim) orientation -- the kernel contracts the minor dims.
    wh = w_attn[:, :dec_h].astype(jnp.float32)                           # (dec_h, dec_h)
    we = w_attn[:, dec_h:].astype(jnp.bfloat16)                          # (dec_h, enc_h2)
    # Pack bias + v into one tiny operand: one DMA instead of two.
    bv = jnp.concatenate([b_attn.reshape(dec_h, 1),
                          v_w.reshape(dec_h, 1)], axis=1).astype(jnp.float32)  # (dec_h, 2)

    hid3 = hidden.reshape(B, 1, dec_h).astype(jnp.float32)               # free reshape

    out3 = pl.pallas_call(
        attention_kernel,
        out_shape=jax.ShapeDtypeStruct((B, 1, src_len), jnp.float32),
        grid=(B,),
        in_specs=[
            pl.BlockSpec((1, 1, dec_h), lambda b: (b, 0, 0)),            # hidden row b
            pl.BlockSpec((1, src_len, enc_h2), lambda b: (b, 0, 0)),     # enc slab b
            pl.BlockSpec((dec_h, enc_h2), lambda b: (0, 0)),             # we (grid-invariant)
            pl.BlockSpec((dec_h, dec_h), lambda b: (0, 0)),              # wh (grid-invariant)
            pl.BlockSpec((dec_h, 2), lambda b: (0, 0)),                  # bias + v
        ],
        out_specs=pl.BlockSpec((1, 1, src_len), lambda b: (b, 0, 0)),
        compiler_params=pltpu.CompilerParams(
            dimension_semantics=("parallel",),        # shard batch over TCs (v7x: 2)
            vmem_limit_bytes=64 * 1024 * 1024,        # explicit budget; per-step usage is small
        ),
    )(hid3, enc_prepared, we, wh, bv)
    return out3.reshape(B, src_len)                                      # free reshape


def attention_ref(hidden, encoder_outputs, w_attn, b_attn, v_w):
    """Pure-JAX reference mirroring the PyTorch forward exactly (f32)."""
    src_len = encoder_outputs.shape[0]
    hid = jnp.repeat(hidden[:, None, :], src_len, axis=1)                # (B, src_len, dec_h)
    enc = jnp.transpose(encoder_outputs, (1, 0, 2))                      # (B, src_len, 2*enc_h)
    cat = jnp.concatenate([hid, enc], axis=2)
    energy = jnp.tanh(cat @ w_attn.T + b_attn)
    attn = (energy @ v_w.T)[..., 0]
    return jax.nn.softmax(attn, axis=1)


if __name__ == "__main__":
    enc_h, dec_h = 32, 32
    batch, src_len = 2, 8
    enc_h2 = 2 * enc_h

    key = jax.random.PRNGKey(0)
    k1, k2, k3, k4, k5 = jax.random.split(key, 5)

    # Deterministic PyTorch-style uniform(-1/sqrt(fan_in), 1/sqrt(fan_in)) init.
    fan_attn = enc_h2 + dec_h
    bound_attn = 1.0 / jnp.sqrt(jnp.float32(fan_attn))
    w_attn = jax.random.uniform(k1, (dec_h, fan_attn), jnp.float32,
                                -bound_attn, bound_attn)
    b_attn = jax.random.uniform(k2, (dec_h,), jnp.float32, -bound_attn, bound_attn)
    bound_v = 1.0 / jnp.sqrt(jnp.float32(dec_h))
    v_w = jax.random.uniform(k3, (1, dec_h), jnp.float32, -bound_v, bound_v)

    # Inputs (PyTorch layouts).
    hidden = jax.random.normal(k4, (batch, dec_h), jnp.float32)
    encoder_outputs = jax.random.normal(k5, (src_len, batch, enc_h2), jnp.float32)

    # Prepare encoder outputs ONCE (in a real seq2seq decoder this sits outside
    # the per-timestep loop and is reused by every attention call).
    enc_prepared = prepare_encoder_outputs(encoder_outputs)

    out = attention_forward(hidden, enc_prepared, w_attn, b_attn, v_w)
    out = jax.block_until_ready(out)

    ref = attention_ref(hidden, encoder_outputs, w_attn, b_attn, v_w)
    assert out.shape == (batch, src_len)
    # Only the encoder-path matmul runs in bf16 on the MXU; everything else is
    # f32 and the softmax normalization is exact -> tight agreement with f32 ref.
    assert jnp.allclose(out, ref, rtol=2e-2, atol=2e-3), (out, ref)
    # Rows are a proper probability simplex (exact reciprocal in the kernel).
    assert jnp.allclose(jnp.sum(out, axis=1), jnp.ones((batch,)), atol=1e-5)

    print("KERNEL_OK")
</pallas_src>

<mosaic_0001>
module attributes {stable_mosaic.version = 11 : i64} {
  func.func @attention_kernel(%arg0: i32, %arg1: memref<1x1x32xf32, #tpu.memory_space<vmem>>, %arg2: memref<1x8x64xbf16, #tpu.memory_space<vmem>>, %arg3: memref<32x64xbf16, #tpu.memory_space<vmem>>, %arg4: memref<32x32xf32, #tpu.memory_space<vmem>>, %arg5: memref<32x2xf32, #tpu.memory_space<vmem>>, %arg6: memref<1x1x8xf32, #tpu.memory_space<vmem>>) attributes {dimension_semantics = [#tpu.dimension_semantics<parallel>], iteration_bounds = array<i64: 2>, scalar_prefetch = 0 : i64, scratch_operands = 0 : i64, tpu.core_type = #tpu.core_type<tc>, window_params = [{transform_indices = @transform_0, window_bounds = array<i64: 1, 1, 32>}, {transform_indices = @transform_1, window_bounds = array<i64: 1, 8, 64>}, {pipeline_mode = #tpu.pipeline_mode<synchronous>, transform_indices = @transform_2, window_bounds = array<i64: 32, 64>}, {pipeline_mode = #tpu.pipeline_mode<synchronous>, transform_indices = @transform_3, window_bounds = array<i64: 32, 32>}, {pipeline_mode = #tpu.pipeline_mode<synchronous>, transform_indices = @transform_4, window_bounds = array<i64: 32, 2>}, {transform_indices = @transform_5, window_bounds = array<i64: 1, 1, 8>}]} {
    %c0 = arith.constant 0 : index
    %c0_0 = arith.constant 0 : index
    %c0_1 = arith.constant 0 : index
    %0 = vector.load %arg2[%c0, %c0_0, %c0_1] : memref<1x8x64xbf16, #tpu.memory_space<vmem>>, vector<1x8x64xbf16>
    %1 = vector.shape_cast %0 : vector<1x8x64xbf16> to vector<8x64xbf16>
    %c0_2 = arith.constant 0 : index
    %c0_3 = arith.constant 0 : index
    %c0_4 = arith.constant 0 : index
    %2 = vector.load %arg1[%c0_2, %c0_3, %c0_4] : memref<1x1x32xf32, #tpu.memory_space<vmem>>, vector<1x1x32xf32>
    %3 = vector.shape_cast %2 : vector<1x1x32xf32> to vector<1x32xf32>
    %c0_5 = arith.constant 0 : index
    %c0_6 = arith.constant 0 : index
    %4 = vector.load %arg4[%c0_5, %c0_6] : memref<32x32xf32, #tpu.memory_space<vmem>>, vector<32x32xf32>
    %5 = vector.broadcast %3 : vector<1x32xf32> to vector<32x32xf32>
    %6 = arith.mulf %4, %5 : vector<32x32xf32>
    %cst = arith.constant dense<0.000000e+00> : vector<32xf32>
    %7 = vector.multi_reduction <add>, %6, %cst [1] : vector<32x32xf32> to vector<32xf32>
    %8 = vector.shape_cast %7 : vector<32xf32> to vector<32x1xf32>
    %c0_7 = arith.constant 0 : index
    %c0_8 = arith.constant 0 : index
    %9 = vector.load %arg3[%c0_7, %c0_8] : memref<32x64xbf16, #tpu.memory_space<vmem>>, vector<32x64xbf16>
    %cst_9 = arith.constant dense<0.000000e+00> : vector<32x8xf32>
    %10 = tpu.matmul %9, %1, %cst_9 {dimension_numbers = #tpu.dot_dimension_numbers<[1], [1], [0], [0], [0, 0, 1, 0], [], []>} : vector<32x64xbf16>, vector<8x64xbf16>, vector<32x8xf32> -> vector<32x8xf32>
    %11 = vector.broadcast %8 : vector<32x1xf32> to vector<32x8xf32>
    %12 = arith.addf %10, %11 : vector<32x8xf32>
    %c0_10 = arith.constant 0 : index
    %c0_11 = arith.constant 0 : index
    %13 = vector.load %arg5[%c0_10, %c0_11] : memref<32x2xf32, #tpu.memory_space<vmem>>, vector<32x1xf32>
    %14 = vector.broadcast %13 : vector<32x1xf32> to vector<32x8xf32>
    %15 = arith.addf %12, %14 : vector<32x8xf32>
    %16 = math.tanh %15 : vector<32x8xf32>
    %c0_12 = arith.constant 0 : index
    %c1 = arith.constant 1 : index
    %17 = vector.load %arg5[%c0_12, %c1] : memref<32x2xf32, #tpu.memory_space<vmem>>, vector<32x1xf32>
    %18 = vector.broadcast %17 : vector<32x1xf32> to vector<32x8xf32>
    %19 = arith.mulf %16, %18 : vector<32x8xf32>
    %cst_13 = arith.constant dense<0.000000e+00> : vector<8xf32>
    %20 = vector.multi_reduction <add>, %19, %cst_13 [0] : vector<32x8xf32> to vector<8xf32>
    %21 = vector.shape_cast %20 : vector<8xf32> to vector<1x8xf32>
    %cst_14 = arith.constant dense<0xFF800000> : vector<1xf32>
    %22 = vector.multi_reduction <maximumf>, %21, %cst_14 [1] : vector<1x8xf32> to vector<1xf32>
    %23 = vector.shape_cast %22 : vector<1xf32> to vector<1x1xf32>
    %24 = vector.broadcast %23 : vector<1x1xf32> to vector<1x8xf32>
    %25 = arith.subf %21, %24 : vector<1x8xf32>
    %26 = math.exp %25 : vector<1x8xf32>
    %cst_15 = arith.constant dense<0.000000e+00> : vector<1xf32>
    %27 = vector.multi_reduction <add>, %26, %cst_15 [1] : vector<1x8xf32> to vector<1xf32>
    %28 = vector.shape_cast %27 : vector<1xf32> to vector<1x1xf32>
    %29 = vector.broadcast %28 : vector<1x1xf32> to vector<1x8xf32>
    %30 = arith.divf %26, %29 : vector<1x8xf32>
    %c0_16 = arith.constant 0 : index
    %c0_17 = arith.constant 0 : index
    %c0_18 = arith.constant 0 : index
    %31 = vector.load %arg6[%c0_16, %c0_17, %c0_18] : memref<1x1x8xf32, #tpu.memory_space<vmem>>, vector<1x1x8xf32>
    %32 = vector.shape_cast %31 : vector<1x1x8xf32> to vector<1x8xf32>
    %33 = vector.shape_cast %30 : vector<1x8xf32> to vector<1x1x8xf32>
    tpu.vector_store %arg6[%c0_16, %c0_17, %c0_18], %33 {strides = array<i32>} : memref<1x1x8xf32, #tpu.memory_space<vmem>>, vector<1x1x8xf32>,
    return
  }
  func.func @transform_0(%arg0: i32) -> (i32, i32, i32) {
    %c0_i32 = arith.constant 0 : i32
    %c0_i32_0 = arith.constant 0 : i32
    %c0_i32_1 = arith.constant 0 : i32
    return %arg0, %c0_i32, %c0_i32_0 : i32, i32, i32
  }
  func.func @transform_1(%arg0: i32) -> (i32, i32, i32) {
    %c0_i32 = arith.constant 0 : i32
    %c0_i32_0 = arith.constant 0 : i32
    %c0_i32_1 = arith.constant 0 : i32
    return %arg0, %c0_i32, %c0_i32_0 : i32, i32, i32
  }
  func.func @transform_2(%arg0: i32) -> (i32, i32) {
    %c0_i32 = arith.constant 0 : i32
    %c0_i32_0 = arith.constant 0 : i32
    %c0_i32_1 = arith.constant 0 : i32
    return %c0_i32, %c0_i32_0 : i32, i32
  }
  func.func @transform_3(%arg0: i32) -> (i32, i32) {
    %c0_i32 = arith.constant 0 : i32
    %c0_i32_0 = arith.constant 0 : i32
    %c0_i32_1 = arith.constant 0 : i32
    return %c0_i32, %c0_i32_0 : i32, i32
  }
  func.func @transform_4(%arg0: i32) -> (i32, i32) {
    %c0_i32 = arith.constant 0 : i32
    %c0_i32_0 = arith.constant 0 : i32
    %c0_i32_1 = arith.constant 0 : i32
    return %c0_i32, %c0_i32_0 : i32, i32
  }
  func.func @transform_5(%arg0: i32) -> (i32, i32, i32) {
    %c0_i32 = arith.constant 0 : i32
    %c0_i32_0 = arith.constant 0 : i32
    %c0_i32_1 = arith.constant 0 : i32
    return %arg0, %c0_i32, %c0_i32_0 : i32, i32, i32
  }
}

</mosaic_0001>

<llo_original>
// kernel: tpu_custom_call.1
$region0: #{tpu_custom_call.1}
  #allocation0 [shape = 'u32[]', space=smem, size = 0x4, offset = 0x4, fixed_abs, tag = 'smem constant byte address 0x4 - core index']
  #allocation1 [shape = 'u32[72,128]{1,0:T(1,128)}', space=vmem, size = 0x9000, scoped, tag = 'internal scratch']
  %s0 = inlined_call_operand.vmem [shape: f32[2,1,32], index: 0, kind: input, shape index: {}]
  %s1 = inlined_call_operand.hbm [shape: bf16[2,8,64], index: 1, kind: input, shape index: {}]
  %s2 = inlined_call_operand.hbm [shape: bf16[32,64], index: 2, kind: input, shape index: {}]
  %s3 = inlined_call_operand.vmem [shape: f32[32,32], index: 3, kind: input, shape index: {}]
  %s4 = inlined_call_operand.vmem [shape: f32[32,2], index: 4, kind: input, shape index: {}]
  %s5 = inlined_call_operand.hbm [shape: f32[2,1,8], index: 5, kind: output, shape index: {}]
  %s6 = sld [smem:[#allocation0]]
  $region61: #{tpu_custom_call.1} parent=0
    _
  %s8 = ssub.s32 1, %s6
  %s9 = scalar_select 0, %s8, %s6
  $region1: #{tpu_custom_call.1} parent=0
    #allocation2 [shape = 'u8[4096]{0}', space=vmem, size = 0x1000, scoped, tag = 'input window, operand 1']
    #allocation3 [shape = 's32[2]{0}', space=sflag, size = 0x8, scoped, tag = 'scoped memory for tpu_custom_call.1']
    #allocation4 [shape = 's32[2]{0}', space=sflag, size = 0x8, scoped, tag = 'scoped memory for tpu_custom_call.1']
    #allocation5 [shape = 'u8[8192]{0}', space=vmem, size = 0x2000, scoped, tag = 'input window, operand 2, single buffered']
    #allocation6 [shape = 's32[1]{0}', space=sflag, size = 0x4, scoped, tag = 'scoped memory for tpu_custom_call.1']
    #allocation7 [shape = 'u8[1024]{0}', space=vmem, size = 0x400, scoped, tag = 'output window, operand 0']
    %10 = vsyncpa [#allocation3], 0
    %s11 = scalar_lea.sflag [#allocation3], 1
    %12 = vsyncpa %s11, 0
    %13 = vsyncpa [#allocation6], 0
    %14 = vsyncpa [#allocation4], 0
    %s15 = scalar_lea.sflag [#allocation4], 1
    %16 = vsyncpa %s15, 0
    loop: start=0, step=1, limit=4
    $region2: #{tpu_custom_call.1} parent=1 // loop_pre_header
      _
    $region3: #{tpu_custom_call.1} parent=1 // loop_header
      %s18 = sphi 0, %s22
      %p19 = scmp.ge.s32.totalorder %s18, 4
      %s28 = sphi 0, %s30
      %s31 = sphi 0, %s28
      %s32 = sphi 0, %s31
      %s48 = sphi 0, %s32
      %s54 = sphi 0, %s56
      %s57 = sphi 0, %s54
      %s58 = sphi 0, %s57
      %s74 = sphi 0, %s58
      %s78 = sphi 0, %s78
      %s80 = sphi 0, %s78
      %s81 = sphi 0, %s80
      %s95 = sphi 0, %s81
      %s99 = sphi 0, %s99
      %s101 = sphi 0, %s99
      %s102 = sphi 0, %s101
      %s116 = sphi 0, %s102
      %s120 = sphi 0, %s120
      %s122 = sphi 0, %s120
      %s123 = sphi 0, %s122
      %s137 = sphi 0, %s123
      %s143 = sphi 0, %s145
      %s146 = sphi 0, %s143
      %s147 = sphi 0, %s146
      %s163 = sphi 0, %s147
    $region4: #{tpu_custom_call.1} parent=1 // loop_header_branch
      %21 = sbr.rel (%p19) target = $region8
    $region5: #{tpu_custom_call.1} parent=1 // loop_body
      %s23 = ssub.s32 %s18, 1
      %s24 = ssub.s32 %s18, 2
      %s25 = sadd.s32 %s18, 1
      %s26 = ssub.s32 %s18, %s25
      %p27 = scmp.eq.s32.totalorder %s26, 0
      %s29 = sadd.s32 %s28, 1
      %s30 = scalar_select %p27, %s28, %s29
      %p33 = pneg %p27
      %p34 = scmp.eq.s32.totalorder %s18, 1
      %p35 = por %p33, %p34
      %p36 = scmp.ne.s32.totalorder %s28, %s31
      %p37 = scmp.eq.s32.totalorder %s18, 0
      %p38 = por %p36, %p37
      %p39 = scmp.ne.s32.totalorder %s28, %s31
      %p40 = scmp.eq.s32.totalorder %s23, 1
      %p41 = por %p39, %p40
      %p42 = scmp.ne.s32.totalorder %s31, %s32
      %p43 = scmp.eq.s32.totalorder %s23, 0
      %p44 = por %p42, %p43
      %p45 = scmp.ne.s32.totalorder %s31, %s32
      %p46 = scmp.eq.s32.totalorder %s24, 1
      %p47 = por %p45, %p46
      %p49 = scmp.ne.s32.totalorder %s32, %s48
      %p50 = scmp.eq.s32.totalorder %s24, 0
      %p51 = por %p49, %p50
      %s52 = ssub.s32 %s18, %s25
      %p53 = scmp.eq.s32.totalorder %s52, 0
      %s55 = sadd.s32 %s54, 1
      %s56 = scalar_select %p53, %s54, %s55
      %p59 = pneg %p53
      %p60 = scmp.eq.s32.totalorder %s18, 1
      %p61 = por %p59, %p60
      %p62 = scmp.ne.s32.totalorder %s54, %s57
      %p63 = scmp.eq.s32.totalorder %s18, 0
      %p64 = por %p62, %p63
      %p65 = scmp.ne.s32.totalorder %s54, %s57
      %p66 = scmp.eq.s32.totalorder %s23, 1
      %p67 = por %p65, %p66
      %p68 = scmp.ne.s32.totalorder %s57, %s58
      %p69 = scmp.eq.s32.totalorder %s23, 0
      %p70 = por %p68, %p69
      %p71 = scmp.ne.s32.totalorder %s57, %s58
      %p72 = scmp.eq.s32.totalorder %s24, 1
      %p73 = por %p71, %p72
      %p75 = scmp.ne.s32.totalorder %s58, %s74
      %p76 = scmp.eq.s32.totalorder %s24, 0
      %p77 = por %p75, %p76
      %s79 = sadd.s32 %s78, 1
      %p82 = scmp.eq.s32.totalorder %s18, 1
      %p83 = scmp.ne.s32.totalorder %s78, %s80
      %p84 = scmp.eq.s32.totalorder %s18, 0
      %p85 = por %p83, %p84
      %p86 = scmp.ne.s32.totalorder %s78, %s80
      %p87 = scmp.eq.s32.totalorder %s23, 1
      %p88 = por %p86, %p87
      %p89 = scmp.ne.s32.totalorder %s80, %s81
      %p90 = scmp.eq.s32.totalorder %s23, 0
      %p91 = por %p89, %p90
      %p92 = scmp.ne.s32.totalorder %s80, %s81
      %p93 = scmp.eq.s32.totalorder %s24, 1
      %p94 = por %p92, %p93
      %p96 = scmp.ne.s32.totalorder %s81, %s95
      %p97 = scmp.eq.s32.totalorder %s24, 0
      %p98 = por %p96, %p97
      %s100 = sadd.s32 %s99, 1
      %p103 = scmp.eq.s32.totalorder %s18, 1
      %p104 = scmp.ne.s32.totalorder %s99, %s101
      %p105 = scmp.eq.s32.totalorder %s18, 0
      %p106 = por %p104, %p105
      %p107 = scmp.ne.s32.totalorder %s99, %s101
      %p108 = scmp.eq.s32.totalorder %s23, 1
      %p109 = por %p107, %p108
      %p110 = scmp.ne.s32.totalorder %s101, %s102
      %p111 = scmp.eq.s32.totalorder %s23, 0
      %p112 = por %p110, %p111
      %p113 = scmp.ne.s32.totalorder %s101, %s102
      %p114 = scmp.eq.s32.totalorder %s24, 1
      %p115 = por %p113, %p114
      %p117 = scmp.ne.s32.totalorder %s102, %s116
      %p118 = scmp.eq.s32.totalorder %s24, 0
      %p119 = por %p117, %p118
      %s121 = sadd.s32 %s120, 1
      %p124 = scmp.eq.s32.totalorder %s18, 1
      %p125 = scmp.ne.s32.totalorder %s120, %s122
      %p126 = scmp.eq.s32.totalorder %s18, 0
      %p127 = por %p125, %p126
      %p128 = scmp.ne.s32.totalorder %s120, %s122
      %p129 = scmp.eq.s32.totalorder %s23, 1
      %p130 = por %p128, %p129
      %p131 = scmp.ne.s32.totalorder %s122, %s123
      %p132 = scmp.eq.s32.totalorder %s23, 0
      %p133 = por %p131, %p132
      %p134 = scmp.ne.s32.totalorder %s122, %s123
      %p135 = scmp.eq.s32.totalorder %s24, 1
      %p136 = por %p134, %p135
      %p138 = scmp.ne.s32.totalorder %s123, %s137
      %p139 = scmp.eq.s32.totalorder %s24, 0
      %p140 = por %p138, %p139
      %s141 = ssub.s32 %s18, %s25
      %p142 = scmp.eq.s32.totalorder %s141, 0
      %s144 = sadd.s32 %s143, 1
      %s145 = scalar_select %p142, %s143, %s144
      %p148 = pneg %p142
      %p149 = scmp.eq.s32.totalorder %s18, 1
      %p150 = por %p148, %p149
      %p151 = scmp.ne.s32.totalorder %s143, %s146
      %p152 = scmp.eq.s32.totalorder %s18, 0
      %p153 = por %p151, %p152
      %p154 = scmp.ne.s32.totalorder %s143, %s146
      %p155 = scmp.eq.s32.totalorder %s23, 1
      %p156 = por %p154, %p155
      %p157 = scmp.ne.s32.totalorder %s146, %s147
      %p158 = scmp.eq.s32.totalorder %s23, 0
      %p159 = por %p157, %p158
      %p160 = scmp.ne.s32.totalorder %s146, %s147
      %p161 = scmp.eq.s32.totalorder %s24, 1
      %p162 = por %p160, %p161
      %p164 = scmp.ne.s32.totalorder %s147, %s163
      %p165 = scmp.eq.s32.totalorder %s24, 0
      %p166 = por %p164, %p165
      %p167 = scmp.le.s32.totalorder 1, %s18
      %p168 = scmp.lt.s32.totalorder %s18, 3
      %p169 = pnand %p167, %p168
      %p170 = pneg %p169
      // Predicated region
      $region9: #{tpu_custom_call.1} parent=5 // pred_check
        _
      $region10: #{tpu_custom_call.1} parent=5 // pred_check_branch
        %172 = sbr.rel (%p169) target = $region12
      $region11: #{tpu_custom_call.1} parent=5 // pred_region
        %s173 = ssub.s32 %s18, 1
        // Predicated region
        $region13: #{tpu_custom_call.1} parent=11 // pred_check
          %p174 = pneg %p91
        $region14: #{tpu_custom_call.1} parent=11 // pred_check_branch
          %176 = sbr.rel (%p174) target = $region16
        $region15: #{tpu_custom_call.1} parent=11 // pred_region
          %178 = vsyncadd [#allocation6], 0
          %s179 = sshll.u32 %s2, 4
          %s180 = int_to_ptr.hbm [resolvable:$true] %s179
          %s181 = sshll.u32 [#allocation5], 4
          %s182 = int_to_ptr.vmem [resolvable:$true] %s181
          %187 = dma.hbm_to_vmem [thread:$0]  %s180, 256, %s182, [#allocation6], 64, 64, 4
        $region16: #{tpu_custom_call.1} parent=11 // pred_fallthru
          _
        // Predicated region
        $region17: #{tpu_custom_call.1} parent=11 // pred_check
          %p188 = pneg %p112
        $region18: #{tpu_custom_call.1} parent=11 // pred_check_branch
          %190 = sbr.rel (%p188) target = $region20
        $region19: #{tpu_custom_call.1} parent=11 // pred_region
          _
        $region20: #{tpu_custom_call.1} parent=11 // pred_fallthru
          _
        // Predicated region
        $region21: #{tpu_custom_call.1} parent=11 // pred_check
          %p191 = pneg %p133
        $region22: #{tpu_custom_call.1} parent=11 // pred_check_branch
          %193 = sbr.rel (%p191) target = $region24
        $region23: #{tpu_custom_call.1} parent=11 // pred_region
          _
        $region24: #{tpu_custom_call.1} parent=11 // pred_fallthru
          _
      $region12: #{tpu_custom_call.1} parent=5 // pred_fallthru
        _
      %p194 = scmp.lt.s32.totalorder %s18, 2
      // Predicated region
      $region25: #{tpu_custom_call.1} parent=5 // pred_check
        %p195 = pneg %p194
      $region26: #{tpu_custom_call.1} parent=5 // pred_check_branch
        %197 = sbr.rel (%p195) target = $region28
      $region27: #{tpu_custom_call.1} parent=5 // pred_region
        // Predicated region
        $region29: #{tpu_custom_call.1} parent=27 // pred_check
          %p198 = pneg %p38
        $region30: #{tpu_custom_call.1} parent=27 // pred_check_branch
          %200 = sbr.rel (%p198) target = $region32
        $region31: #{tpu_custom_call.1} parent=27 // pred_region
          %p201 = scmp.lt.s32.totalorder %s18, 1
          %s202 = scalar_select %p201, %s18, 1
          %s203 = scalar_lea.vmem %s0, %s202
        $region32: #{tpu_custom_call.1} parent=27 // pred_fallthru
          _
        // Predicated region
        $region33: #{tpu_custom_call.1} parent=27 // pred_check
          %p204 = pneg %p64
        $region34: #{tpu_custom_call.1} parent=27 // pred_check_branch
          %206 = sbr.rel (%p204) target = $region36
        $region35: #{tpu_custom_call.1} parent=27 // pred_region
          %s207 = sand.u32 %s54, 1
          %s208 = scalar_lea.sflag [#allocation3], %s207
          %s209 = sand.u32 %s54, 1
          %s210 = smul.addr %s209, 4
          %s211 = scalar_lea.vmem [#allocation2], %s210
          %213 = vsyncadd %s208, 0
          %s214 = smul.addr %s18, 4
          %s215 = scalar_lea.hbm %s1, %s214
          %s217 = sshll.u32 %s215, 4
          %s218 = int_to_ptr.hbm [resolvable:$true] %s217
          %s219 = sshll.u32 %s211, 4
          %s220 = int_to_ptr.vmem [resolvable:$true] %s219
          %222 = dma.hbm_to_vmem [thread:$0]  %s218, 64, %s220, %s208
        $region36: #{tpu_custom_call.1} parent=27 // pred_fallthru
          _
      $region28: #{tpu_custom_call.1} parent=5 // pred_fallthru
        _
      %p223 = scmp.le.s32.totalorder 1, %s18
      %p224 = scmp.lt.s32.totalorder %s18, 3
      %p225 = pnand %p223, %p224
      %p226 = pneg %p225
      // Predicated region
      $region37: #{tpu_custom_call.1} parent=5 // pred_check
        _
      $region38: #{tpu_custom_call.1} parent=5 // pred_check_branch
        %228 = sbr.rel (%p225) target = $region40
      $region39: #{tpu_custom_call.1} parent=5 // pred_region
        %s229 = ssub.s32 %s18, 1
        %s230 = sand.u32 %s57, 1
        %s231 = scalar_lea.sflag [#allocation3], %s230
        %s232 = sand.u32 %s57, 1
        %s233 = smul.addr %s232, 4
        %s234 = scalar_lea.vmem [#allocation2], %s233
        // Predicated region
        $region41: #{tpu_custom_call.1} parent=39 // pred_check
          %p235 = pneg %p70
        $region42: #{tpu_custom_call.1} parent=39 // pred_check_branch
          %237 = sbr.rel (%p235) target = $region44
        $region43: #{tpu_custom_call.1} parent=39 // pred_region
          %239 = dma.done %s231, 64
        $region44: #{tpu_custom_call.1} parent=39 // pred_fallthru
          _
        // Predicated region
        $region45: #{tpu_custom_call.1} parent=39 // pred_check
          %p240 = pneg %p91
        $region46: #{tpu_custom_call.1} parent=39 // pred_check_branch
          %242 = sbr.rel (%p240) target = $region48
        $region47: #{tpu_custom_call.1} parent=39 // pred_region
          %244 = dma.done [#allocation6], 256
        $region48: #{tpu_custom_call.1} parent=39 // pred_fallthru
          _
        %p245 = scmp.lt.s32.totalorder %s23, 1
        %s246 = scalar_select %p245, %s23, 1
        %s247 = scalar_lea.vmem %s0, %s246
        %p248 = pneg %p44
        %p249 = pneg %p41
        %s250 = sand.u32 %s57, 1
        %s251 = scalar_lea.sflag [#allocation3], %s250
        %s252 = sand.u32 %s57, 1
        %s253 = smul.addr %s252, 4
        %s254 = scalar_lea.vmem [#allocation2], %s253
        %p255 = pneg %p70
        %p256 = pneg %p67
        %p257 = pneg %p91
        %p258 = pneg %p88
        %p259 = pneg %p112
        %p260 = pneg %p109
        %p261 = pneg %p133
        %p262 = pneg %p130
        %p263 = pneg %p159
        %p264 = pneg %p156
        %s265 = sand.u32 %s146, 1
        %s266 = scalar_lea.sflag [#allocation4], %s265
        %s267 = sand.u32 %s146, 1
        %s268 = scalar_lea.vmem [#allocation7], %s267
        %p269 = scmp.lt.s32.totalorder %s23, 1
        %s270 = scalar_select %p269, %s23, 1
        %s271 = scalar_lea.vmem %s0, %s270
        %v273 = vld [vmem:[%s234] sm:$0xf]
        %v274 = vld [vmem:[%s271] sm:$0x1]
        %v275 = vld [vmem:[%s3] sm:$0xff]
        %v276 = vld [vmem:[%s3 + $0x8] sm:$0xff]
        %v277 = vld [vmem:[%s3 + $0x10] sm:$0xff]
        %v278 = vld [vmem:[%s3 + $0x18] sm:$0xff]
        %v280 = vperm.slane %v274, 0
        %v282 = vmul.f32 %v275, %v280
        %v283 = vmul.f32 %v276, %v280
        %v284 = vmul.f32 %v277, %v280
        %v285 = vmul.f32 %v278, %v280
        %vm286 = vcmask 261120
        %v287 = vsel %vm286, %v282, 0.0
        %288 = vadd.xlane.f32.xlu0 %v287
        %v289 = vpop.xlane.xlu0 %288
        %v290 = vsel %vm286, %v283, 0.0
        %291 = vadd.xlane.f32.xlu0 %v290
        %v292 = vpop.xlane.xlu0 %291
        %v293 = vsel %vm286, %v284, 0.0
        %294 = vadd.xlane.f32.xlu0 %v293
        %v295 = vpop.xlane.xlu0 %294
        %v296 = vsel %vm286, %v285, 0.0
        %297 = vadd.xlane.f32.xlu0 %v296
        %v298 = vpop.xlane.xlu0 %297
        %v299 = vld [vmem:[#allocation5] sm:$0xf]
        %v300 = vld [vmem:[#allocation5 + $0x4] sm:$0xf]
        %v301 = vld [vmem:[#allocation5 + $0x8] sm:$0xf]
        %v302 = vld [vmem:[#allocation5 + $0xc] sm:$0xf]
        %v307 = vunpack.c.l.b16 %v299
        %v308 = vunpack.c.l.b16 %v300
        %v309 = vunpack.c.l.b16 %v301
        %v310 = vunpack.c.l.b16 %v302
        %v311 = vpack.c.b16 %v308, %v307
        %v312 = vpack.c.b16 %v310, %v309
        %vm313 = vcmask 523264
        %v315 = vsel %vm313, %v311, 0
        %v318 = vsel %vm313, %v312, 0
        %v321 = vsel %vm313, %v273, 0
        %323 = vmatpush.bf16.xpose.msra.mxu0 0
        %324 = vmatpush.bf16.xpose.msra.mxu0 0
        %325 = vmatpush.bf16.xpose.msra.mxu0 0
        %326 = vmatpush.bf16.xpose.msra.mxu0 0
        %327 = vmatpush.bf16.xpose.msra.mxu0 0
        %328 = vmatpush.bf16.xpose.msra.mxu0 0
        %329 = vmatpush.bf16.xpose.msra.mxu0 0
        %330 = vmatpush.bf16.xpose.msra.mxu0 %v321
        %331 = vmatmul.bf16.gmra.mxu0 %v315
        %v332 = vpop.f32.mrf.mxu0
        %v333 = vadd.f32 %v289, %v332
        %v334 = vpop.f32.mrf.mxu0
        %v335 = vadd.f32 %v292, %v334
        %336 = vmatmul.bf16.gmra.mxu0 %v318
        %v337 = vpop.f32.mrf.mxu0
        %v338 = vadd.f32 %v295, %v337
        %v339 = vpop.f32.mrf.mxu0
        %v340 = vadd.f32 %v298, %v339
        %341 = vdwg.mxu0
        %v342 = vld [vmem:[%s4] sm:$0xff]
        %v343 = vld [vmem:[%s4 + $0x8] sm:$0xff]
        %v344 = vld [vmem:[%s4 + $0x10] sm:$0xff]
        %v345 = vld [vmem:[%s4 + $0x18] sm:$0xff]
        %347 = vset.pattern.permute.xlu0 0
        %348 = vperm.xlu0 %347, %v342
        %v349 = vpop.permute.xlu0 %348
        %352 = vset.pattern.permute.xlu0 0
        %353 = vperm.xlu0 %352, %v343
        %v354 = vpop.permute.xlu0 %353
        %357 = vset.pattern.permute.xlu0 0
        %358 = vperm.xlu0 %357, %v344
        %v359 = vpop.permute.xlu0 %358
        %362 = vset.pattern.permute.xlu0 0
        %363 = vperm.xlu0 %362, %v345
        %v364 = vpop.permute.xlu0 %363
        %v366 = vadd.f32 %v333, %v349
        %v367 = vadd.f32 %v335, %v354
        %v368 = vadd.f32 %v338, %v359
        %v369 = vadd.f32 %v340, %v364
        %v370 = vtanh.pop %v366
        %v371 = vtanh.pop %v367
        %v372 = vtanh.pop %v368
        %v373 = vtanh.pop %v369
        %374 = vset.pattern.permute.xlu0 1
        %375 = vperm.xlu0 %374, %v342
        %v376 = vpop.permute.xlu0 %375
        %378 = vset.pattern.permute.xlu0 1
        %379 = vperm.xlu0 %378, %v343
        %v380 = vpop.permute.xlu0 %379
        %382 = vset.pattern.permute.xlu0 1
        %383 = vperm.xlu0 %382, %v344
        %v384 = vpop.permute.xlu0 %383
        %386 = vset.pattern.permute.xlu0 1
        %387 = vperm.xlu0 %386, %v345
        %v388 = vpop.permute.xlu0 %387
        %v390 = vmul.f32 %v370, %v376
        %v391 = vmul.f32 %v371, %v380
        %v392 = vmul.f32 %v372, %v384
        %v393 = vmul.f32 %v373, %v388
        %vm394 = vcmask 64512
        %v395 = vsel %vm394, %v390, 0.0
        %v396 = vsel %vm394, %v391, 0.0
        %v397 = vadd.f32 %v395, %v396
        %v398 = vsel %vm394, %v392, 0.0
        %v399 = vadd.f32 %v397, %v398
        %v400 = vsel %vm394, %v393, 0.0
        %v401 = vadd.f32 %v399, %v400
        %v402 = vrot.slane %v401, 4
        %v403 = vadd.f32 %v401, %v402
        %v404 = vrot.slane %v403, 2
        %v405 = vadd.f32 %v403, %v404
        %v406 = vrot.slane %v405, 1
        %v407 = vadd.f32 %v405, %v406
        %v408 = vsel %vm394, %v407, -inf
        %409 = vmax.xlane.f32.xlu0 %v408
        %v410 = vpop.xlane.xlu0 %409
        %v411 = vsub.f32 %v407, %v410
        %v412 = vmul.f32 %v411, 1.442695
        %v413 = vpow.pop %v412
        %v414 = vsel %vm394, %v413, 0.0
        %415 = vadd.xlane.f32.xlu0 %v414
        %v416 = vpop.xlane.xlu0 %415
        %v417 = vrcp.pop %v416
        %v418 = vmul.f32 %v416, %v417
        %v419 = vsub.f32 1.0, %v418
        %v420 = vmul.f32 %v417, %v419
        %v421 = vadd.f32 %v417, %v420
        %vm422 = vweird.f32 %v416
        %vm423 = vweird.f32 %v417
        %vm424 = vmor %vm422, %vm423
        %v425 = vsel %vm424, %v417, %v421
        %v426 = vand.u32 2147483647, %v416
        %vm427 = vcmp.eq.f32.partialorder %v426, 8.507059e+37
        %v428 = vand.u32 %v416, 2147483648
        %v429 = vor.u32 1.1754944e-38, %v428
        %v430 = vsel %vm427, %v429, %v425
        %v431 = vmul.f32 %v413, %v430
        %vm432 = vcmask 57344
        %433 = vst.msk [vmem:[%s268] sm:$0x1] %vm432, %v431
        %s434 = sand.u32 %s146, 1
        %s435 = scalar_lea.sflag [#allocation4], %s434
        %s436 = sand.u32 %s146, 1
        %s437 = scalar_lea.vmem [#allocation7], %s436
        // Predicated region
        $region49: #{tpu_custom_call.1} parent=39 // pred_check
          %p438 = pneg %p156
        $region50: #{tpu_custom_call.1} parent=39 // pred_check_branch
          %440 = sbr.rel (%p438) target = $region52
        $region51: #{tpu_custom_call.1} parent=39 // pred_region
          %442 = vsyncadd %s435, 0
          %s443 = scalar_lea.hbm %s5, %s23
          %s445 = sshll.u32 %s437, 4
          %s446 = int_to_ptr.vmem [resolvable:$true] %s445
          %s447 = sshll.u32 %s443, 4
          %s448 = int_to_ptr.hbm [resolvable:$true] %s447
          %450 = dma.vmem_to_hbm [thread:$0]  %s446, 16, %s448, %s435
        $region52: #{tpu_custom_call.1} parent=39 // pred_fallthru
          _
      $region40: #{tpu_custom_call.1} parent=5 // pred_fallthru
        _
      %p451 = scmp.le.s32.totalorder 2, %s18
      // Predicated region
      $region53: #{tpu_custom_call.1} parent=5 // pred_check
        %p452 = pneg %p451
      $region54: #{tpu_custom_call.1} parent=5 // pred_check_branch
        %454 = sbr.rel (%p452) target = $region56
      $region55: #{tpu_custom_call.1} parent=5 // pred_region
        %s455 = ssub.s32 %s18, 2
        // Predicated region
        $region57: #{tpu_custom_call.1} parent=55 // pred_check
          %p456 = pneg %p162
        $region58: #{tpu_custom_call.1} parent=55 // pred_check_branch
          %458 = sbr.rel (%p456) target = $region60
        $region59: #{tpu_custom_call.1} parent=55 // pred_region
          %s459 = sand.u32 %s147, 1
          %s460 = scalar_lea.sflag [#allocation4], %s459
          %s461 = sand.u32 %s147, 1
          %s462 = scalar_lea.vmem [#allocation7], %s461
          %464 = dma.done %s460, 16
        $region60: #{tpu_custom_call.1} parent=55 // pred_fallthru
          _
      $region56: #{tpu_custom_call.1} parent=5 // pred_fallthru
        _
    $region6: #{tpu_custom_call.1} parent=1 // loop_footer
      %s22 = sadd.s32 1, %s18
    $region7: #{tpu_custom_call.1} parent=1 // loop_footer_branch
      %17 = sbr.rel target = $region3
    $region8: #{tpu_custom_call.1} parent=1 // loop_exit
      _
    %465 = vsyncpa [#allocation3], 1
    %s466 = scalar_lea.sflag [#allocation3], 1
    %467 = vsyncpa %s466, 1
    %468 = vsyncpa [#allocation6], 1
    %469 = vsyncpa [#allocation4], 1
    %s470 = scalar_lea.sflag [#allocation4], 1
    %471 = vsyncpa %s470, 1

</llo_original>
